<compile_context>
chip_gen: v7x
topology: tpu7x:2x2x1
jax: 0.10.0
libtpu: 0.0.40
codegen_flags: <defaults>
</compile_context>

<pallas_src>
import functools

import jax
import jax.numpy as jnp
import numpy as np
from jax import lax
from jax.experimental import pallas as pl
from jax.experimental.pallas import tpu as pltpu


def _conv_in_relu_kernel(x_ref, w_ref, gb_ref, o_ref, tap_ref, *,
                         K, H, W, Wp, nb):
    """One grid step == `nb` batch images.

    x_ref:   (nb, Cin, L)      bf16 reflection-padded images, spatial axis
                               flattened; L = (Hp+1)*Wp (one extra reflected
                               row keeps every shifted tap view in-bounds).
    w_ref:   (Cout, K*K*Cin)   bf16 conv weight, (kh, kw, cin) tap order.
    gb_ref:  (2*Cout, 1)       f32; rows [0:Cout]=gamma, [Cout:2*Cout]=beta.
    o_ref:   (nb, Cout, LP)    f32 lane-dense output, LP = round_up(H*Wp,128);
                               lanes >= H*Wp (and w >= W) are garbage the
                               wrapper strips.
    tap_ref: (K*K*Cin, LP)     bf16 VMEM scratch holding the K*K shifted tap
                               views, so the conv is ONE contraction-(K*K*Cin)
                               MXU matmul per image instead of K*K tiny dots.
    """
    cin = x_ref.shape[1]
    cout = w_ref.shape[0]
    hwp = H * Wp
    lp = o_ref.shape[2]
    inv_n = 1.0 / float(H * W)

    gamma = gb_ref[0:cout, :]            # (Cout, 1)
    beta = gb_ref[cout:2 * cout, :]      # (Cout, 1)

    # Valid-lane mask: lane j <-> (h, w) = divmod(j, Wp); real outputs need
    # j < H*Wp and w < W (padded-width columns / alignment lanes are garbage
    # and are masked out of the InstanceNorm statistics).
    lane = lax.broadcasted_iota(jnp.int32, (1, lp), 1)
    valid = (lane < hwp) & ((lane % Wp) < W)

    # The lane-alignment tail of the staging scratch is never overwritten by
    # the tap copies; keep it zero so the padded output lanes stay finite.
    kkc = tap_ref.shape[0]
    tap_ref[:, hwp:lp] = jnp.zeros((kkc, lp - hwp), tap_ref.dtype)

    # nb is capped at 4 by the wrapper, so a static unroll keeps vreg live
    # ranges small (per-image state dies once o_ref[b] is stored).
    for b in range(nb):
        # Stage the K*K shifted tap views (one lane-rotated copy each) ...
        for kh in range(K):
            for kw in range(K):
                tap = kh * K + kw
                d = kh * Wp + kw
                tap_ref[tap * cin:(tap + 1) * cin, 0:hwp] = \
                    x_ref[b, :, d:d + hwp]
        # ... then a single bf16 MXU matmul, contraction = K*K*Cin.
        acc = jnp.dot(w_ref[...], tap_ref[...],
                      preferred_element_type=jnp.float32)
        # NOTE: conv bias intentionally omitted -- InstanceNorm's per-channel
        # mean subtraction cancels it exactly (norm=True variant only).

        # InstanceNorm2d (PyTorch defaults: biased var, eps=1e-5) over valid
        # spatial positions only; single-pass sum / sum-of-squares in f32.
        yv = jnp.where(valid, acc, 0.0)
        s1 = jnp.sum(yv, axis=1, keepdims=True)                # (Cout, 1)
        s2 = jnp.sum(yv * yv, axis=1, keepdims=True)           # (Cout, 1)
        mean = s1 * inv_n
        var = jnp.maximum(s2 * inv_n - mean * mean, 0.0)
        scale = gamma * lax.rsqrt(var + 1e-5)                  # (Cout, 1)
        y = (acc - mean) * scale + beta

        # ReLU
        o_ref[b] = jnp.maximum(y, 0.0)


def _pick_images_per_step(n):
    """Images per grid step: keep grid extent >= 2 (v7x has two TensorCores),
    then batch up to 4 images per step to amortize per-step overhead."""
    for cand in range(min(n, 4), 0, -1):
        if n % cand == 0 and n // cand >= min(n, 2):
            return cand
    return 1


@functools.partial(jax.jit, static_argnames=("kernel_size",))
def conv_block(x, weight, bias, gamma, beta, *, kernel_size):
    """Forward of Conv(in_ch, out_ch, K, stride=1, norm=True, activation=True).

    x:      (N, Cin, H, W)  float32 NCHW
    weight: (Cout, Cin, K, K)
    bias:   (Cout,)  -- accepted for interface parity; mathematically a no-op
                        here because InstanceNorm removes the per-channel mean
                        (do NOT reuse this wrapper for the norm=False variant).
    gamma:  (Cout,)  beta: (Cout,)
    returns (N, Cout, H, W) float32
    """
    del bias  # cancelled exactly by the InstanceNorm mean subtraction
    N, Cin, H, W = x.shape
    Cout = weight.shape[0]
    K = kernel_size
    assert K % 2 == 1, "odd kernel sizes only ('same' output with stride=1)"
    pad = K // 2
    assert pad + 1 < H and pad < W, "reflection padding requires small pad"
    Hp, Wp = H + 2 * pad, W + 2 * pad
    HWp = H * Wp
    LP = -(-HWp // 128) * 128            # lane-aligned output width
    L = (Hp + 1) * Wp                    # one extra reflected bottom row

    # Single reflection pad: the bottom side is padded by pad+1 so the
    # flattened image already carries the tail every shifted tap view needs
    # (the extra row's values only ever feed invalid, stripped lanes).
    # bf16 halves HBM/DMA bytes and feeds the MXU at native rate; stats stay
    # in f32 inside the kernel.
    xb = x.astype(jnp.bfloat16)
    xp = jnp.pad(xb, ((0, 0), (0, 0), (pad, pad + 1), (pad, pad)),
                 mode="reflect")
    xf = xp.reshape(N, Cin, L)

    # (Cout, Cin, K, K) -> (Cout, K*K*Cin) with (kh, kw, cin) ordering to
    # match the staged tap rows in the kernel.
    w_flat = jnp.transpose(weight, (0, 2, 3, 1)).reshape(Cout, K * K * Cin)
    w_flat = w_flat.astype(jnp.bfloat16)
    gb = jnp.concatenate([gamma, beta]).reshape(2 * Cout, 1).astype(jnp.float32)

    nb = _pick_images_per_step(N)

    kernel = functools.partial(_conv_in_relu_kernel,
                               K=K, H=H, W=W, Wp=Wp, nb=nb)
    cost = pl.CostEstimate(
        flops=2 * N * Cout * Cin * K * K * H * W,
        transcendentals=N * Cout,
        bytes_accessed=(N * Cin * L * 2 + Cout * K * K * Cin * 2
                        + 2 * Cout * 4 + N * Cout * LP * 4),
    )
    # TODO(synk): for large Cout/H*W (v7x 64 MiB VMEM) add a second "parallel"
    # grid axis over Cout tiles (per-channel stats stay independent) and cap
    # nb so double-buffered blocks stay well under the scoped VMEM limit.
    out = pl.pallas_call(
        kernel,
        out_shape=jax.ShapeDtypeStruct((N, Cout, LP), jnp.float32),
        grid_spec=pltpu.PrefetchScalarGridSpec(
            num_scalar_prefetch=0,
            grid=(N // nb,),
            in_specs=[
                pl.BlockSpec((nb, Cin, L), lambda n: (n, 0, 0)),
                pl.BlockSpec((Cout, K * K * Cin), lambda n: (0, 0)),
                pl.BlockSpec((2 * Cout, 1), lambda n: (0, 0)),
            ],
            out_specs=pl.BlockSpec((nb, Cout, LP), lambda n: (n, 0, 0)),
            scratch_shapes=[pltpu.VMEM((K * K * Cin, LP), jnp.bfloat16)],
        ),
        compiler_params=pltpu.CompilerParams(
            dimension_semantics=("parallel",)),
        cost_estimate=cost,
    )(xf, w_flat, gb)

    # Strip lane-alignment padding, view as padded-width rows, strip the K-1
    # garbage columns per spatial row. XLA fuses the two slices into one copy.
    return out[:, :, :HWp].reshape(N, Cout, H, Wp)[:, :, :, :W]


def _reference(x, weight, bias, gamma, beta, kernel_size):
    # Reference mirrors the kernel's MXU precision (bf16 operands, f32 acc)
    # so the comparison isolates kernel bugs rather than bf16 rounding.
    pad = kernel_size // 2
    xb = x.astype(jnp.bfloat16)
    wb = weight.astype(jnp.bfloat16)
    xp = jnp.pad(xb, ((0, 0), (0, 0), (pad, pad), (pad, pad)), mode="reflect")
    y = lax.conv_general_dilated(
        xp, wb, window_strides=(1, 1), padding="VALID",
        dimension_numbers=("NCHW", "OIHW", "NCHW"),
        preferred_element_type=jnp.float32)
    y = y + bias.reshape(1, -1, 1, 1)
    mean = jnp.mean(y, axis=(2, 3), keepdims=True)
    var = jnp.mean((y - mean) ** 2, axis=(2, 3), keepdims=True)
    y = (y - mean) * lax.rsqrt(var + 1e-5)
    y = y * gamma.reshape(1, -1, 1, 1) + beta.reshape(1, -1, 1, 1)
    return jnp.maximum(y, 0.0)


if __name__ == "__main__":
    # Conv(in_channels=4, out_channels=8, kernel_size=3, stride=1,
    #      upsample=False, norm=True, activation=True)
    N, Cin, H, W = 2, 4, 16, 16
    Cout, K = 8, 3

    key = jax.random.PRNGKey(0)
    kx, kw, kb, kg, kbe = jax.random.split(key, 5)
    x = jax.random.normal(kx, (N, Cin, H, W), dtype=jnp.float32)
    weight = jax.random.normal(kw, (Cout, Cin, K, K), dtype=jnp.float32) * 0.1
    bias = jax.random.normal(kb, (Cout,), dtype=jnp.float32) * 0.1
    # InstanceNorm2d(affine=True) init is gamma=1, beta=0; perturb a bit so
    # the affine path is exercised.
    gamma = 1.0 + 0.1 * jax.random.normal(kg, (Cout,), dtype=jnp.float32)
    beta = 0.1 * jax.random.normal(kbe, (Cout,), dtype=jnp.float32)

    out = conv_block(x, weight, bias, gamma, beta, kernel_size=K)
    out = jax.block_until_ready(out)

    ref = _reference(x, weight, bias, gamma, beta, K)
    np.testing.assert_allclose(np.asarray(out), np.asarray(ref),
                               rtol=1e-3, atol=1e-3)
    print("KERNEL_OK")
</pallas_src>

<mosaic_0001>
module attributes {stable_mosaic.version = 11 : i64} {
  func.func @_conv_in_relu_kernel(%arg0: i32, %arg1: memref<1x4x342xbf16, #tpu.memory_space<vmem>>, %arg2: memref<8x36xbf16, #tpu.memory_space<vmem>>, %arg3: memref<16x1xf32, #tpu.memory_space<vmem>>, %arg4: memref<1x8x384xf32, #tpu.memory_space<vmem>>, %arg5: memref<36x384xbf16, #tpu.memory_space<vmem>>) attributes {dimension_semantics = [#tpu.dimension_semantics<parallel>], iteration_bounds = array<i64: 2>, scalar_prefetch = 0 : i64, scratch_operands = 1 : i64, tpu.core_type = #tpu.core_type<tc>, window_params = [{transform_indices = @transform_0, window_bounds = array<i64: 1, 4, 342>}, {pipeline_mode = #tpu.pipeline_mode<synchronous>, transform_indices = @transform_1, window_bounds = array<i64: 8, 36>}, {pipeline_mode = #tpu.pipeline_mode<synchronous>, transform_indices = @transform_2, window_bounds = array<i64: 16, 1>}, {transform_indices = @transform_3, window_bounds = array<i64: 1, 8, 384>}]} {
    %c0 = arith.constant 0 : index
    %c0_0 = arith.constant 0 : index
    %0 = vector.load %arg3[%c0, %c0_0] : memref<16x1xf32, #tpu.memory_space<vmem>>, vector<8x1xf32>
    %c8 = arith.constant 8 : index
    %c0_1 = arith.constant 0 : index
    %1 = vector.load %arg3[%c8, %c0_1] : memref<16x1xf32, #tpu.memory_space<vmem>>, vector<8x1xf32>
    %2 = tpu.iota {dimensions = array<i32: 1>} : vector<1x384xi32>
    %c288_i32 = arith.constant 288 : i32
    %3 = vector.broadcast %c288_i32 : i32 to vector<1x384xi32>
    %4 = arith.cmpi slt, %2, %3 : vector<1x384xi32>
    %c18_i32 = arith.constant 18 : i32
    %c0_i32 = arith.constant 0 : i32
    %5 = arith.cmpi eq, %c18_i32, %c0_i32 : i32
    %c1_i32 = arith.constant 1 : i32
    %6 = arith.select %5, %c1_i32, %c18_i32 : i32
    %7 = vector.broadcast %6 : i32 to vector<1x384xi32>
    %8 = arith.remsi %2, %7 : vector<1x384xi32>
    %c0_i32_2 = arith.constant 0 : i32
    %9 = vector.broadcast %c0_i32_2 : i32 to vector<1x384xi32>
    %10 = arith.cmpi ne, %8, %9 : vector<1x384xi32>
    %c0_i32_3 = arith.constant 0 : i32
    %11 = vector.broadcast %c0_i32_3 : i32 to vector<1x384xi32>
    %12 = arith.cmpi slt, %8, %11 : vector<1x384xi32>
    %c0_i32_4 = arith.constant 0 : i32
    %13 = arith.cmpi slt, %6, %c0_i32_4 : i32
    %14 = vector.broadcast %13 : i1 to vector<1x384xi1>
    %15 = vector.broadcast %14 : vector<1x384xi1> to vector<1x384xi1>
    %16 = arith.xori %12, %15 : vector<1x384xi1>
    %17 = arith.andi %16, %10 : vector<1x384xi1>
    %18 = vector.broadcast %6 : i32 to vector<1x384xi32>
    %19 = arith.addi %8, %18 : vector<1x384xi32>
    %20 = arith.select %17, %19, %8 : vector<1x384xi1>, vector<1x384xi32>
    %c16_i32 = arith.constant 16 : i32
    %21 = vector.broadcast %c16_i32 : i32 to vector<1x384xi32>
    %22 = arith.cmpi slt, %20, %21 : vector<1x384xi32>
    %23 = arith.andi %4, %22 : vector<1x384xi1>
    %cst = arith.constant 0.000000e+00 : bf16
    %24 = vector.broadcast %cst : bf16 to vector<36x96xbf16>
    %c0_5 = arith.constant 0 : index
    %c288 = arith.constant 288 : index
    %25 = vector.load %arg5[%c0_5, %c288] : memref<36x384xbf16, #tpu.memory_space<vmem>>, vector<36x96xbf16>
    tpu.vector_store %arg5[%c0_5, %c288], %24 {strides = array<i32>} : memref<36x384xbf16, #tpu.memory_space<vmem>>, vector<36x96xbf16>,
    %c0_6 = arith.constant 0 : index
    %c0_7 = arith.constant 0 : index
    %c0_8 = arith.constant 0 : index
    %26 = vector.load %arg1[%c0_6, %c0_7, %c0_8] : memref<1x4x342xbf16, #tpu.memory_space<vmem>>, vector<1x4x288xbf16>
    %27 = vector.shape_cast %26 : vector<1x4x288xbf16> to vector<4x288xbf16>
    %c0_9 = arith.constant 0 : index
    %c0_10 = arith.constant 0 : index
    %28 = vector.load %arg5[%c0_9, %c0_10] : memref<36x384xbf16, #tpu.memory_space<vmem>>, vector<4x288xbf16>
    tpu.vector_store %arg5[%c0_9, %c0_10], %27 {strides = array<i32>} : memref<36x384xbf16, #tpu.memory_space<vmem>>, vector<4x288xbf16>,
    %c0_11 = arith.constant 0 : index
    %c0_12 = arith.constant 0 : index
    %c1 = arith.constant 1 : index
    %29 = vector.load %arg1[%c0_11, %c0_12, %c1] : memref<1x4x342xbf16, #tpu.memory_space<vmem>>, vector<1x4x288xbf16>
    %30 = vector.shape_cast %29 : vector<1x4x288xbf16> to vector<4x288xbf16>
    %c4 = arith.constant 4 : index
    %c0_13 = arith.constant 0 : index
    %31 = vector.load %arg5[%c4, %c0_13] : memref<36x384xbf16, #tpu.memory_space<vmem>>, vector<4x288xbf16>
    tpu.vector_store %arg5[%c4, %c0_13], %30 {strides = array<i32>} : memref<36x384xbf16, #tpu.memory_space<vmem>>, vector<4x288xbf16>,
    %c0_14 = arith.constant 0 : index
    %c0_15 = arith.constant 0 : index
    %c2 = arith.constant 2 : index
    %32 = vector.load %arg1[%c0_14, %c0_15, %c2] : memref<1x4x342xbf16, #tpu.memory_space<vmem>>, vector<1x4x288xbf16>
    %33 = vector.shape_cast %32 : vector<1x4x288xbf16> to vector<4x288xbf16>
    %c8_16 = arith.constant 8 : index
    %c0_17 = arith.constant 0 : index
    %34 = vector.load %arg5[%c8_16, %c0_17] : memref<36x384xbf16, #tpu.memory_space<vmem>>, vector<4x288xbf16>
    tpu.vector_store %arg5[%c8_16, %c0_17], %33 {strides = array<i32>} : memref<36x384xbf16, #tpu.memory_space<vmem>>, vector<4x288xbf16>,
    %c0_18 = arith.constant 0 : index
    %c0_19 = arith.constant 0 : index
    %c18 = arith.constant 18 : index
    %35 = vector.load %arg1[%c0_18, %c0_19, %c18] : memref<1x4x342xbf16, #tpu.memory_space<vmem>>, vector<1x4x288xbf16>
    %36 = vector.shape_cast %35 : vector<1x4x288xbf16> to vector<4x288xbf16>
    %c12 = arith.constant 12 : index
    %c0_20 = arith.constant 0 : index
    %37 = vector.load %arg5[%c12, %c0_20] : memref<36x384xbf16, #tpu.memory_space<vmem>>, vector<4x288xbf16>
    tpu.vector_store %arg5[%c12, %c0_20], %36 {strides = array<i32>} : memref<36x384xbf16, #tpu.memory_space<vmem>>, vector<4x288xbf16>,
    %c0_21 = arith.constant 0 : index
    %c0_22 = arith.constant 0 : index
    %c19 = arith.constant 19 : index
    %38 = vector.load %arg1[%c0_21, %c0_22, %c19] : memref<1x4x342xbf16, #tpu.memory_space<vmem>>, vector<1x4x288xbf16>
    %39 = vector.shape_cast %38 : vector<1x4x288xbf16> to vector<4x288xbf16>
    %c16 = arith.constant 16 : index
    %c0_23 = arith.constant 0 : index
    %40 = vector.load %arg5[%c16, %c0_23] : memref<36x384xbf16, #tpu.memory_space<vmem>>, vector<4x288xbf16>
    tpu.vector_store %arg5[%c16, %c0_23], %39 {strides = array<i32>} : memref<36x384xbf16, #tpu.memory_space<vmem>>, vector<4x288xbf16>,
    %c0_24 = arith.constant 0 : index
    %c0_25 = arith.constant 0 : index
    %c20 = arith.constant 20 : index
    %41 = vector.load %arg1[%c0_24, %c0_25, %c20] : memref<1x4x342xbf16, #tpu.memory_space<vmem>>, vector<1x4x288xbf16>
    %42 = vector.shape_cast %41 : vector<1x4x288xbf16> to vector<4x288xbf16>
    %c20_26 = arith.constant 20 : index
    %c0_27 = arith.constant 0 : index
    %43 = vector.load %arg5[%c20_26, %c0_27] : memref<36x384xbf16, #tpu.memory_space<vmem>>, vector<4x288xbf16>
    tpu.vector_store %arg5[%c20_26, %c0_27], %42 {strides = array<i32>} : memref<36x384xbf16, #tpu.memory_space<vmem>>, vector<4x288xbf16>,
    %c0_28 = arith.constant 0 : index
    %c0_29 = arith.constant 0 : index
    %c36 = arith.constant 36 : index
    %44 = vector.load %arg1[%c0_28, %c0_29, %c36] : memref<1x4x342xbf16, #tpu.memory_space<vmem>>, vector<1x4x288xbf16>
    %45 = vector.shape_cast %44 : vector<1x4x288xbf16> to vector<4x288xbf16>
    %c24 = arith.constant 24 : index
    %c0_30 = arith.constant 0 : index
    %46 = vector.load %arg5[%c24, %c0_30] : memref<36x384xbf16, #tpu.memory_space<vmem>>, vector<4x288xbf16>
    tpu.vector_store %arg5[%c24, %c0_30], %45 {strides = array<i32>} : memref<36x384xbf16, #tpu.memory_space<vmem>>, vector<4x288xbf16>,
    %c0_31 = arith.constant 0 : index
    %c0_32 = arith.constant 0 : index
    %c37 = arith.constant 37 : index
    %47 = vector.load %arg1[%c0_31, %c0_32, %c37] : memref<1x4x342xbf16, #tpu.memory_space<vmem>>, vector<1x4x288xbf16>
    %48 = vector.shape_cast %47 : vector<1x4x288xbf16> to vector<4x288xbf16>
    %c28 = arith.constant 28 : index
    %c0_33 = arith.constant 0 : index
    %49 = vector.load %arg5[%c28, %c0_33] : memref<36x384xbf16, #tpu.memory_space<vmem>>, vector<4x288xbf16>
    tpu.vector_store %arg5[%c28, %c0_33], %48 {strides = array<i32>} : memref<36x384xbf16, #tpu.memory_space<vmem>>, vector<4x288xbf16>,
    %c0_34 = arith.constant 0 : index
    %c0_35 = arith.constant 0 : index
    %c38 = arith.constant 38 : index
    %50 = vector.load %arg1[%c0_34, %c0_35, %c38] : memref<1x4x342xbf16, #tpu.memory_space<vmem>>, vector<1x4x288xbf16>
    %51 = vector.shape_cast %50 : vector<1x4x288xbf16> to vector<4x288xbf16>
    %c32 = arith.constant 32 : index
    %c0_36 = arith.constant 0 : index
    %52 = vector.load %arg5[%c32, %c0_36] : memref<36x384xbf16, #tpu.memory_space<vmem>>, vector<4x288xbf16>
    tpu.vector_store %arg5[%c32, %c0_36], %51 {strides = array<i32>} : memref<36x384xbf16, #tpu.memory_space<vmem>>, vector<4x288xbf16>,
    %c0_37 = arith.constant 0 : index
    %c0_38 = arith.constant 0 : index
    %53 = vector.load %arg2[%c0_37, %c0_38] : memref<8x36xbf16, #tpu.memory_space<vmem>>, vector<8x36xbf16>
    %c0_39 = arith.constant 0 : index
    %c0_40 = arith.constant 0 : index
    %54 = vector.load %arg5[%c0_39, %c0_40] : memref<36x384xbf16, #tpu.memory_space<vmem>>, vector<36x384xbf16>
    %cst_41 = arith.constant dense<0.000000e+00> : vector<8x384xf32>
    %55 = tpu.matmul %53, %54, %cst_41 {dimension_numbers = #tpu.dot_dimension_numbers<[1], [0], [0], [1], [0, 0, 1, 1], [], []>} : vector<8x36xbf16>, vector<36x384xbf16>, vector<8x384xf32> -> vector<8x384xf32>
    %cst_42 = arith.constant 0.000000e+00 : f32
    %56 = vector.shape_cast %23 : vector<1x384xi1> to vector<1x384xi1>
    %57 = vector.broadcast %56 : vector<1x384xi1> to vector<8x384xi1>
    %58 = vector.broadcast %cst_42 : f32 to vector<8x384xf32>
    %59 = arith.select %57, %55, %58 : vector<8x384xi1>, vector<8x384xf32>
    %cst_43 = arith.constant dense<0.000000e+00> : vector<8xf32>
    %60 = vector.multi_reduction <add>, %59, %cst_43 [1] : vector<8x384xf32> to vector<8xf32>
    %61 = vector.shape_cast %60 : vector<8xf32> to vector<8x1xf32>
    %62 = arith.mulf %59, %59 : vector<8x384xf32>
    %cst_44 = arith.constant dense<0.000000e+00> : vector<8xf32>
    %63 = vector.multi_reduction <add>, %62, %cst_44 [1] : vector<8x384xf32> to vector<8xf32>
    %64 = vector.shape_cast %63 : vector<8xf32> to vector<8x1xf32>
    %cst_45 = arith.constant 3.906250e-03 : f32
    %65 = vector.broadcast %cst_45 : f32 to vector<8x1xf32>
    %66 = arith.mulf %61, %65 : vector<8x1xf32>
    %cst_46 = arith.constant 3.906250e-03 : f32
    %67 = vector.broadcast %cst_46 : f32 to vector<8x1xf32>
    %68 = arith.mulf %64, %67 : vector<8x1xf32>
    %69 = arith.mulf %66, %66 : vector<8x1xf32>
    %70 = arith.subf %68, %69 : vector<8x1xf32>
    %cst_47 = arith.constant 0.000000e+00 : f32
    %71 = vector.broadcast %cst_47 : f32 to vector<8x1xf32>
    %72 = arith.maximumf %70, %71 : vector<8x1xf32>
    %cst_48 = arith.constant 9.99999974E-6 : f32
    %73 = vector.broadcast %cst_48 : f32 to vector<8x1xf32>
    %74 = arith.addf %72, %73 : vector<8x1xf32>
    %75 = math.rsqrt %74 : vector<8x1xf32>
    %76 = arith.mulf %0, %75 : vector<8x1xf32>
    %77 = vector.broadcast %66 : vector<8x1xf32> to vector<8x384xf32>
    %78 = arith.subf %55, %77 : vector<8x384xf32>
    %79 = vector.broadcast %76 : vector<8x1xf32> to vector<8x384xf32>
    %80 = arith.mulf %78, %79 : vector<8x384xf32>
    %81 = vector.broadcast %1 : vector<8x1xf32> to vector<8x384xf32>
    %82 = arith.addf %80, %81 : vector<8x384xf32>
    %cst_49 = arith.constant 0.000000e+00 : f32
    %83 = vector.broadcast %cst_49 : f32 to vector<8x384xf32>
    %84 = arith.maximumf %82, %83 : vector<8x384xf32>
    %c0_50 = arith.constant 0 : index
    %c0_51 = arith.constant 0 : index
    %c0_52 = arith.constant 0 : index
    %85 = vector.load %arg4[%c0_50, %c0_51, %c0_52] : memref<1x8x384xf32, #tpu.memory_space<vmem>>, vector<1x8x384xf32>
    %86 = vector.shape_cast %85 : vector<1x8x384xf32> to vector<8x384xf32>
    %87 = vector.shape_cast %84 : vector<8x384xf32> to vector<1x8x384xf32>
    tpu.vector_store %arg4[%c0_50, %c0_51, %c0_52], %87 {strides = array<i32>} : memref<1x8x384xf32, #tpu.memory_space<vmem>>, vector<1x8x384xf32>,
    return
  }
  func.func @transform_0(%arg0: i32) -> (i32, i32, i32) {
    %c0_i32 = arith.constant 0 : i32
    %c0_i32_0 = arith.constant 0 : i32
    %c0_i32_1 = arith.constant 0 : i32
    return %arg0, %c0_i32, %c0_i32_0 : i32, i32, i32
  }
  func.func @transform_1(%arg0: i32) -> (i32, i32) {
    %c0_i32 = arith.constant 0 : i32
    %c0_i32_0 = arith.constant 0 : i32
    %c0_i32_1 = arith.constant 0 : i32
    return %c0_i32, %c0_i32_0 : i32, i32
  }
  func.func @transform_2(%arg0: i32) -> (i32, i32) {
    %c0_i32 = arith.constant 0 : i32
    %c0_i32_0 = arith.constant 0 : i32
    %c0_i32_1 = arith.constant 0 : i32
    return %c0_i32, %c0_i32_0 : i32, i32
  }
  func.func @transform_3(%arg0: i32) -> (i32, i32, i32) {
    %c0_i32 = arith.constant 0 : i32
    %c0_i32_0 = arith.constant 0 : i32
    %c0_i32_1 = arith.constant 0 : i32
    return %arg0, %c0_i32, %c0_i32_0 : i32, i32, i32
  }
}

</mosaic_0001>

<llo_original>
// kernel: conv_block.1
$region0: #{conv_block.1}
  #allocation0 [shape = 'u32[]', space=smem, size = 0x4, offset = 0x4, fixed_abs, tag = 'smem constant byte address 0x4 - core index']
  #allocation1 [shape = 'u32[144,128]{1,0:T(1,128)}', space=vmem, size = 0x12000, scoped, tag = 'internal scratch']
  #allocation2 [shape = 'bf16[36,384]{1,0:T(8,128)(2,1)}', space=vmem, size = 0x7800, scoped, tag = 'scratch operand']
  %s0 = inlined_call_operand.vmem [shape: bf16[2,4,342], index: 0, kind: input, shape index: {}]
  %s1 = inlined_call_operand.vmem [shape: bf16[8,36], index: 1, kind: input, shape index: {}]
  %s2 = inlined_call_operand.vmem [shape: f32[16,1], index: 2, kind: input, shape index: {}]
  %s3 = inlined_call_operand.vmem [shape: f32[2,8,384], index: 3, kind: output, shape index: {}]
  %s4 = sld [smem:[#allocation0]]
  $region45: #{conv_block.1} parent=0
    _
  %s6 = ssub.s32 1, %s4
  %s7 = scalar_select 0, %s6, %s4
  loop: start=0, step=1, limit=4
  $region2: #{conv_block.1} parent=0 // loop_pre_header
    _
  $region3: #{conv_block.1} parent=0 // loop_header
    %s9 = sphi 0, %s13
    %p10 = scmp.ge.s32.totalorder %s9, 4
    %s19 = sphi 0, %s21
    %s22 = sphi 0, %s19
    %s23 = sphi 0, %s22
    %s39 = sphi 0, %s23
    %s43 = sphi 0, %s43
    %s45 = sphi 0, %s43
    %s46 = sphi 0, %s45
    %s60 = sphi 0, %s46
    %s64 = sphi 0, %s64
    %s66 = sphi 0, %s64
    %s67 = sphi 0, %s66
    %s81 = sphi 0, %s67
    %s87 = sphi 0, %s89
    %s90 = sphi 0, %s87
    %s91 = sphi 0, %s90
    %s107 = sphi 0, %s91
  $region4: #{conv_block.1} parent=0 // loop_header_branch
    %12 = sbr.rel (%p10) target = $region8
  $region5: #{conv_block.1} parent=0 // loop_body
    %s14 = ssub.s32 %s9, 1
    %s15 = ssub.s32 %s9, 2
    %s16 = sadd.s32 %s9, 1
    %s17 = ssub.s32 %s9, %s16
    %p18 = scmp.eq.s32.totalorder %s17, 0
    %s20 = sadd.s32 %s19, 1
    %s21 = scalar_select %p18, %s19, %s20
    %p24 = pneg %p18
    %p25 = scmp.eq.s32.totalorder %s9, 1
    %p26 = por %p24, %p25
    %p27 = scmp.ne.s32.totalorder %s19, %s22
    %p28 = scmp.eq.s32.totalorder %s9, 0
    %p29 = por %p27, %p28
    %p30 = scmp.ne.s32.totalorder %s19, %s22
    %p31 = scmp.eq.s32.totalorder %s14, 1
    %p32 = por %p30, %p31
    %p33 = scmp.ne.s32.totalorder %s22, %s23
    %p34 = scmp.eq.s32.totalorder %s14, 0
    %p35 = por %p33, %p34
    %p36 = scmp.ne.s32.totalorder %s22, %s23
    %p37 = scmp.eq.s32.totalorder %s15, 1
    %p38 = por %p36, %p37
    %p40 = scmp.ne.s32.totalorder %s23, %s39
    %p41 = scmp.eq.s32.totalorder %s15, 0
    %p42 = por %p40, %p41
    %s44 = sadd.s32 %s43, 1
    %p47 = scmp.eq.s32.totalorder %s9, 1
    %p48 = scmp.ne.s32.totalorder %s43, %s45
    %p49 = scmp.eq.s32.totalorder %s9, 0
    %p50 = por %p48, %p49
    %p51 = scmp.ne.s32.totalorder %s43, %s45
    %p52 = scmp.eq.s32.totalorder %s14, 1
    %p53 = por %p51, %p52
    %p54 = scmp.ne.s32.totalorder %s45, %s46
    %p55 = scmp.eq.s32.totalorder %s14, 0
    %p56 = por %p54, %p55
    %p57 = scmp.ne.s32.totalorder %s45, %s46
    %p58 = scmp.eq.s32.totalorder %s15, 1
    %p59 = por %p57, %p58
    %p61 = scmp.ne.s32.totalorder %s46, %s60
    %p62 = scmp.eq.s32.totalorder %s15, 0
    %p63 = por %p61, %p62
    %s65 = sadd.s32 %s64, 1
    %p68 = scmp.eq.s32.totalorder %s9, 1
    %p69 = scmp.ne.s32.totalorder %s64, %s66
    %p70 = scmp.eq.s32.totalorder %s9, 0
    %p71 = por %p69, %p70
    %p72 = scmp.ne.s32.totalorder %s64, %s66
    %p73 = scmp.eq.s32.totalorder %s14, 1
    %p74 = por %p72, %p73
    %p75 = scmp.ne.s32.totalorder %s66, %s67
    %p76 = scmp.eq.s32.totalorder %s14, 0
    %p77 = por %p75, %p76
    %p78 = scmp.ne.s32.totalorder %s66, %s67
    %p79 = scmp.eq.s32.totalorder %s15, 1
    %p80 = por %p78, %p79
    %p82 = scmp.ne.s32.totalorder %s67, %s81
    %p83 = scmp.eq.s32.totalorder %s15, 0
    %p84 = por %p82, %p83
    %s85 = ssub.s32 %s9, %s16
    %p86 = scmp.eq.s32.totalorder %s85, 0
    %s88 = sadd.s32 %s87, 1
    %s89 = scalar_select %p86, %s87, %s88
    %p92 = pneg %p86
    %p93 = scmp.eq.s32.totalorder %s9, 1
    %p94 = por %p92, %p93
    %p95 = scmp.ne.s32.totalorder %s87, %s90
    %p96 = scmp.eq.s32.totalorder %s9, 0
    %p97 = por %p95, %p96
    %p98 = scmp.ne.s32.totalorder %s87, %s90
    %p99 = scmp.eq.s32.totalorder %s14, 1
    %p100 = por %p98, %p99
    %p101 = scmp.ne.s32.totalorder %s90, %s91
    %p102 = scmp.eq.s32.totalorder %s14, 0
    %p103 = por %p101, %p102
    %p104 = scmp.ne.s32.totalorder %s90, %s91
    %p105 = scmp.eq.s32.totalorder %s15, 1
    %p106 = por %p104, %p105
    %p108 = scmp.ne.s32.totalorder %s91, %s107
    %p109 = scmp.eq.s32.totalorder %s15, 0
    %p110 = por %p108, %p109
    %p111 = scmp.le.s32.totalorder 1, %s9
    %p112 = scmp.lt.s32.totalorder %s9, 3
    %p113 = pnand %p111, %p112
    %p114 = pneg %p113
    // Predicated region
    $region9: #{conv_block.1} parent=5 // pred_check
      _
    $region10: #{conv_block.1} parent=5 // pred_check_branch
      %116 = sbr.rel (%p113) target = $region12
    $region11: #{conv_block.1} parent=5 // pred_region
      %s117 = ssub.s32 %s9, 1
      // Predicated region
      $region13: #{conv_block.1} parent=11 // pred_check
        %p118 = pneg %p56
      $region14: #{conv_block.1} parent=11 // pred_check_branch
        %120 = sbr.rel (%p118) target = $region16
      $region15: #{conv_block.1} parent=11 // pred_region
        _
      $region16: #{conv_block.1} parent=11 // pred_fallthru
        _
      // Predicated region
      $region17: #{conv_block.1} parent=11 // pred_check
        %p121 = pneg %p77
      $region18: #{conv_block.1} parent=11 // pred_check_branch
        %123 = sbr.rel (%p121) target = $region20
      $region19: #{conv_block.1} parent=11 // pred_region
        _
      $region20: #{conv_block.1} parent=11 // pred_fallthru
        _
    $region12: #{conv_block.1} parent=5 // pred_fallthru
      _
    %p124 = scmp.lt.s32.totalorder %s9, 2
    // Predicated region
    $region21: #{conv_block.1} parent=5 // pred_check
      %p125 = pneg %p124
    $region22: #{conv_block.1} parent=5 // pred_check_branch
      %127 = sbr.rel (%p125) target = $region24
    $region23: #{conv_block.1} parent=5 // pred_region
      // Predicated region
      $region25: #{conv_block.1} parent=23 // pred_check
        %p128 = pneg %p29
      $region26: #{conv_block.1} parent=23 // pred_check_branch
        %130 = sbr.rel (%p128) target = $region28
      $region27: #{conv_block.1} parent=23 // pred_region
        %p131 = scmp.lt.s32.totalorder %s9, 1
        %s132 = scalar_select %p131, %s9, 1
        %s133 = smul.addr %s132, 3
        %s134 = smul.addr %s133, 2
        %s135 = scalar_lea.vmem %s0, %s134
      $region28: #{conv_block.1} parent=23 // pred_fallthru
        _
    $region24: #{conv_block.1} parent=5 // pred_fallthru
      _
    %p136 = scmp.le.s32.totalorder 1, %s9
    %p137 = scmp.lt.s32.totalorder %s9, 3
    %p138 = pnand %p136, %p137
    %p139 = pneg %p138
    // Predicated region
    $region29: #{conv_block.1} parent=5 // pred_check
      _
    $region30: #{conv_block.1} parent=5 // pred_check_branch
      %141 = sbr.rel (%p138) target = $region32
    $region31: #{conv_block.1} parent=5 // pred_region
      %s142 = ssub.s32 %s9, 1
      %p143 = scmp.lt.s32.totalorder %s14, 1
      %s144 = scalar_select %p143, %s14, 1
      %s145 = smul.addr %s144, 3
      %s146 = smul.addr %s145, 2
      %s147 = scalar_lea.vmem %s0, %s146
      %p148 = pneg %p35
      %p149 = pneg %p32
      %p150 = pneg %p56
      %p151 = pneg %p53
      %p152 = pneg %p77
      %p153 = pneg %p74
      %p154 = pneg %p103
      %p155 = pneg %p100
      %p156 = scmp.lt.s32.totalorder %s14, 1
      %s157 = scalar_select %p156, %s14, 1
      %s158 = smul.addr %s157, 3
      %s159 = smul.addr %s158, 8
      %s160 = scalar_lea.vmem %s3, %s159
      %p161 = scmp.lt.s32.totalorder %s14, 1
      %s162 = scalar_select %p161, %s14, 1
      %s163 = smul.addr %s162, 3
      %s164 = smul.addr %s163, 2
      %s165 = scalar_lea.vmem %s0, %s164
      %p166 = scmp.lt.s32.totalorder %s14, 1
      %s167 = scalar_select %p166, %s14, 1
      %s168 = smul.addr %s167, 3
      %s169 = smul.addr %s168, 8
      %s170 = scalar_lea.vmem %s3, %s169
      %v172 = vld [vmem:[%s2] sm:$0xff]
      %v173 = vld [vmem:[%s2 + $0x8] sm:$0xff]
      %v174 = vlaneseq
      %v175 = vand.u32 %v174, 127
      %v176 = vadd.s32 %v175, 128
      %v177 = vadd.s32 %v175, 256
      %vm178 = vcmp.lt.s32.totalorder %v175, 288
      %vm179 = vcmp.lt.s32.totalorder %v176, 288
      %vm180 = vcmp.lt.s32.totalorder %v177, 288
      %vm181 = vcmp.lt.s32.totalorder %v175, 0
      %v182 = vsub.s32 0, %v175
      %v183 = vsel %vm181, %v182, %v175
      %v184 = vmul.u32.u64.compose %v183, 3817748708
      %v185 = vextract.low.u32 %v184
      %v186 = vextract.high.u32 %v184
      %v187 = vshrl.u32 %v186, 4
      %v188 = vmul.u32 %v187, 18
      %v189 = vsub.s32 %v183, %v188
      %v190 = vsub.s32 0, %v189
      %v191 = vsel %vm181, %v190, %v189
      %vm192 = vcmp.lt.s32.totalorder %v176, 0
      %v193 = vsub.s32 0, %v176
      %v194 = vsel %vm192, %v193, %v176
      %v195 = vmul.u32.u64.compose %v194, 3817748708
      %v196 = vextract.low.u32 %v195
      %v197 = vextract.high.u32 %v195
      %v198 = vshrl.u32 %v197, 4
      %v199 = vmul.u32 %v198, 18
      %v200 = vsub.s32 %v194, %v199
      %v201 = vsub.s32 0, %v200
      %v202 = vsel %vm192, %v201, %v200
      %vm203 = vcmp.lt.s32.totalorder %v177, 0
      %v204 = vsub.s32 0, %v177
      %v205 = vsel %vm203, %v204, %v177
      %v206 = vmul.u32.u64.compose %v205, 3817748708
      %v207 = vextract.low.u32 %v206
      %v208 = vextract.high.u32 %v206
      %v209 = vshrl.u32 %v208, 4
      %v210 = vmul.u32 %v209, 18
      %v211 = vsub.s32 %v205, %v210
      %v212 = vsub.s32 0, %v211
      %v213 = vsel %vm203, %v212, %v211
      %vm214 = vcmp.ne.s32.totalorder %v191, 0
      %vm215 = vcmp.ne.s32.totalorder %v202, 0
      %vm216 = vcmp.ne.s32.totalorder %v213, 0
      %vm217 = vcmp.lt.s32.totalorder %v191, 0
      %vm218 = vcmp.lt.s32.totalorder %v202, 0
      %vm219 = vcmp.lt.s32.totalorder %v213, 0
      %vm220 = vmand %vm217, %vm214
      %vm221 = vmand %vm218, %vm215
      %vm222 = vmand %vm219, %vm216
      %v223 = vadd.s32 %v191, 18
      %v224 = vadd.s32 %v202, 18
      %v225 = vadd.s32 %v213, 18
      %v226 = vsel %vm220, %v223, %v191
      %v227 = vsel %vm221, %v224, %v202
      %v228 = vsel %vm222, %v225, %v213
      %vm229 = vcmp.lt.s32.totalorder %v226, 16
      %vm230 = vcmp.lt.s32.totalorder %v227, 16
      %vm231 = vcmp.lt.s32.totalorder %v228, 16
      %vm232 = vmand %vm178, %vm229
      %vm233 = vmand %vm179, %vm230
      %vm234 = vmand %vm180, %vm231
      %vm235 = vcmask 1043712
      %236 = vst.msk [vmem:[#allocation2 + $0x8] sm:$0xf] %vm235, 0
      %237 = vst.msk [vmem:[#allocation2 + $0x14] sm:$0xf] %vm235, 0
      %238 = vst.msk [vmem:[#allocation2 + $0x20] sm:$0xf] %vm235, 0
      %239 = vst.msk [vmem:[#allocation2 + $0x2c] sm:$0xf] %vm235, 0
      %vm240 = vcmask 1041664
      %241 = vst.msk [vmem:[#allocation2 + $0x38] sm:$0x3] %vm240, 0
      %v242 = vld [vmem:[%s165] sm:$0x3f]
      %v244 = vcombine.high %v242, %v242
      %v246 = vunpack.c.l.s4 1983009808
      %v247 = vunpack.c.0.s8 %v246
      %v248 = vlaneseq
      %v249 = vshrl.u32 %v248, 7
      %v250 = vsub.s32 %v247, %v249
      %v251 = vrot.slane %v242, %v250
      %v253 = vunpack.c.l.s4 1983009808
      %v254 = vunpack.c.0.s8 %v253
      %v255 = vlaneseq
      %v256 = vshrl.u32 %v255, 7
      %v257 = vsub.s32 %v254, %v256
      %v258 = vrot.slane %v244, %v257
      %261 = vst [vmem:[#allocation2] sm:$0x33] %v251
      %vm262 = vcmask 254976
      %263 = vst.msk [vmem:[#allocation2 + $0x8] sm:$0x3] %vm262, %v258
      %v264 = vld [vmem:[%s165] sm:$0x3f]
      %v266 = vcombine.low %v264, %v264
      %v268 = vunpack.c.l.s4 1983009808
      %v269 = vunpack.c.0.s8 %v268
      %v270 = vlaneseq
      %v271 = vshrl.u32 %v270, 7
      %v272 = vsub.s32 %v269, %v271
      %v273 = vrot.slane %v266, %v272
      %v275 = vunpack.c.l.s4 1983009808
      %v276 = vunpack.c.0.s8 %v275
      %v277 = vlaneseq
      %v278 = vshrl.u32 %v277, 7
      %v279 = vsub.s32 %v276, %v278
      %v280 = vrot.slane %v264, %v279
      %281 = vrot.lane.b32.xlu0 %v273, 127
      %v282 = vpop.permute.xlu0 %281
      %283 = vrot.lane.b32.xlu0 %v280, 127
      %v284 = vpop.permute.xlu0 %283
      %v285 = vrot.slane %v282, 4
      %v286 = vrot.slane %v284, 4
      %vm287 = vcmask 1043456
      %v288 = vsel %vm287, %v285, %v286
      %vm289 = vcmask 1039360
      %v290 = vsel %vm289, %v282, %v288
      %293 = vst [vmem:[#allocation2] sm:$0xcc] %v290
      %vm294 = vcmask 257026
      %295 = vst.msk [vmem:[#allocation2 + $0x8] sm:$0xc] %vm294, %v284
      %v296 = vld [vmem:[%s165] sm:$0x3f]
      %v298 = vcombine.high %v296, %v296
      %v300 = vunpack.c.l.s4 1983009808
      %v301 = vunpack.c.0.s8 %v300
      %v302 = vlaneseq
      %v303 = vshrl.u32 %v302, 7
      %v304 = vsub.s32 %v301, %v303
      %v305 = vrot.slane %v296, %v304
      %v307 = vunpack.c.l.s4 1983009808
      %v308 = vunpack.c.0.s8 %v307
      %v309 = vlaneseq
      %v310 = vshrl.u32 %v309, 7
      %v311 = vsub.s32 %v308, %v310
      %v312 = vrot.slane %v298, %v311
      %313 = vrot.lane.b32.xlu0 %v305, 126
      %v314 = vpop.permute.xlu0 %313
      %315 = vrot.lane.b32.xlu0 %v312, 126
      %v316 = vpop.permute.xlu0 %315
      %v317 = vrot.slane %v314, 4
      %v318 = vrot.slane %v316, 4
      %v319 = vsel %vm287, %v317, %v318
      %vm320 = vcmask 1031168
      %v321 = vsel %vm320, %v314, %v319
      %324 = vst [vmem:[#allocation2 + $0xc] sm:$0x33] %v321
      %325 = vst.msk [vmem:[#allocation2 + $0x14] sm:$0x3] %vm262, %v316
      %v326 = vld [vmem:[%s165] sm:$0x3f]
      %v328 = vcombine.low %v326, %v326
      %v330 = vunpack.c.l.s4 1983009808
      %v331 = vunpack.c.0.s8 %v330
      %v332 = vlaneseq
      %v333 = vshrl.u32 %v332, 7
      %v334 = vsub.s32 %v331, %v333
      %v335 = vrot.slane %v328, %v334
      %v337 = vunpack.c.l.s4 1983009808
      %v338 = vunpack.c.0.s8 %v337
      %v339 = vlaneseq
      %v340 = vshrl.u32 %v339, 7
      %v341 = vsub.s32 %v338, %v340
      %v342 = vrot.slane %v326, %v341
      %343 = vrot.lane.b32.xlu0 %v335, 110
      %v344 = vpop.permute.xlu0 %343
      %345 = vrot.lane.b32.xlu0 %v342, 110
      %v346 = vpop.permute.xlu0 %345
      %v347 = vrot.slane %v344, 4
      %v348 = vrot.slane %v346, 4
      %v349 = vsel %vm287, %v347, %v348
      %vm350 = vcmask 900096
      %v351 = vsel %vm350, %v344, %v349
      %354 = vst [vmem:[#allocation2 + $0xc] sm:$0xcc] %v351
      %355 = vst.msk [vmem:[#allocation2 + $0x14] sm:$0xc] %vm294, %v346
      %v356 = vld [vmem:[%s165] sm:$0x3f]
      %v358 = vcombine.high %v356, %v356
      %v360 = vunpack.c.l.s4 1983009808
      %v361 = vunpack.c.0.s8 %v360
      %v362 = vlaneseq
      %v363 = vshrl.u32 %v362, 7
      %v364 = vsub.s32 %v361, %v363
      %v365 = vrot.slane %v356, %v364
      %v367 = vunpack.c.l.s4 1983009808
      %v368 = vunpack.c.0.s8 %v367
      %v369 = vlaneseq
      %v370 = vshrl.u32 %v369, 7
      %v371 = vsub.s32 %v368, %v370
      %v372 = vrot.slane %v358, %v371
      %373 = vrot.lane.b32.xlu0 %v365, 109
      %v374 = vpop.permute.xlu0 %373
      %375 = vrot.lane.b32.xlu0 %v372, 109
      %v376 = vpop.permute.xlu0 %375
      %v377 = vrot.slane %v374, 4
      %v378 = vrot.slane %v376, 4
      %v379 = vsel %vm287, %v377, %v378
      %vm380 = vcmask 891904
      %v381 = vsel %vm380, %v374, %v379
      %384 = vst [vmem:[#allocation2 + $0x18] sm:$0x33] %v381
      %385 = vst.msk [vmem:[#allocation2 + $0x20] sm:$0x3] %vm262, %v376
      %v386 = vld [vmem:[%s165] sm:$0x3f]
      %v388 = vcombine.low %v386, %v386
      %v390 = vunpack.c.l.s4 1983009808
      %v391 = vunpack.c.0.s8 %v390
      %v392 = vlaneseq
      %v393 = vshrl.u32 %v392, 7
      %v394 = vsub.s32 %v391, %v393
      %v395 = vrot.slane %v388, %v394
      %v397 = vunpack.c.l.s4 1983009808
      %v398 = vunpack.c.0.s8 %v397
      %v399 = vlaneseq
      %v400 = vshrl.u32 %v399, 7
      %v401 = vsub.s32 %v398, %v400
      %v402 = vrot.slane %v386, %v401
      %403 = vrot.lane.b32.xlu0 %v395, 108
      %v404 = vpop.permute.xlu0 %403
      %405 = vrot.lane.b32.xlu0 %v402, 108
      %v406 = vpop.permute.xlu0 %405
      %v407 = vrot.slane %v404, 4
      %v408 = vrot.slane %v406, 4
      %v409 = vsel %vm287, %v407, %v408
      %vm410 = vcmask 883712
      %v411 = vsel %vm410, %v404, %v409
      %414 = vst [vmem:[#allocation2 + $0x18] sm:$0xcc] %v411
      %415 = vst.msk [vmem:[#allocation2 + $0x20] sm:$0xc] %vm294, %v406
      %v416 = vld [vmem:[%s165] sm:$0x3f]
      %v418 = vcombine.high %v416, %v416
      %v420 = vunpack.c.l.s4 1983009808
      %v421 = vunpack.c.0.s8 %v420
      %v422 = vlaneseq
      %v423 = vshrl.u32 %v422, 7
      %v424 = vsub.s32 %v421, %v423
      %v425 = vrot.slane %v416, %v424
      %v427 = vunpack.c.l.s4 1983009808
      %v428 = vunpack.c.0.s8 %v427
      %v429 = vlaneseq
      %v430 = vshrl.u32 %v429, 7
      %v431 = vsub.s32 %v428, %v430
      %v432 = vrot.slane %v418, %v431
      %433 = vrot.lane.b32.xlu0 %v425, 92
      %v434 = vpop.permute.xlu0 %433
      %435 = vrot.lane.b32.xlu0 %v432, 92
      %v436 = vpop.permute.xlu0 %435
      %v437 = vrot.slane %v434, 4
      %v438 = vrot.slane %v436, 4
      %v439 = vsel %vm287, %v437, %v438
      %vm440 = vcmask 752640
      %v441 = vsel %vm440, %v434, %v439
      %444 = vst [vmem:[#allocation2 + $0x24] sm:$0x33] %v441
      %445 = vst.msk [vmem:[#allocation2 + $0x2c] sm:$0x3] %vm262, %v436
      %v446 = vld [vmem:[%s165] sm:$0x3f]
      %v448 = vcombine.low %v446, %v446
      %v450 = vunpack.c.l.s4 1983009808
      %v451 = vunpack.c.0.s8 %v450
      %v452 = vlaneseq
      %v453 = vshrl.u32 %v452, 7
      %v454 = vsub.s32 %v451, %v453
      %v455 = vrot.slane %v448, %v454
      %v457 = vunpack.c.l.s4 1983009808
      %v458 = vunpack.c.0.s8 %v457
      %v459 = vlaneseq
      %v460 = vshrl.u32 %v459, 7
      %v461 = vsub.s32 %v458, %v460
      %v462 = vrot.slane %v446, %v461
      %463 = vrot.lane.b32.xlu0 %v455, 91
      %v464 = vpop.permute.xlu0 %463
      %465 = vrot.lane.b32.xlu0 %v462, 91
      %v466 = vpop.permute.xlu0 %465
      %v467 = vrot.slane %v464, 4
      %v468 = vrot.slane %v466, 4
      %v469 = vsel %vm287, %v467, %v468
      %vm470 = vcmask 744448
      %v471 = vsel %vm470, %v464, %v469
      %474 = vst [vmem:[#allocation2 + $0x24] sm:$0xcc] %v471
      %475 = vst.msk [vmem:[#allocation2 + $0x2c] sm:$0xc] %vm294, %v466
      %v476 = vld [vmem:[%s165] sm:$0x3f]
      %v478 = vcombine.high %v476, %v476
      %v480 = vunpack.c.l.s4 1983009808
      %v481 = vunpack.c.0.s8 %v480
      %v482 = vlaneseq
      %v483 = vshrl.u32 %v482, 7
      %v484 = vsub.s32 %v481, %v483
      %v485 = vrot.slane %v476, %v484
      %v487 = vunpack.c.l.s4 1983009808
      %v488 = vunpack.c.0.s8 %v487
      %v489 = vlaneseq
      %v490 = vshrl.u32 %v489, 7
      %v491 = vsub.s32 %v488, %v490
      %v492 = vrot.slane %v478, %v491
      %493 = vrot.lane.b32.xlu0 %v485, 90
      %v494 = vpop.permute.xlu0 %493
      %495 = vrot.lane.b32.xlu0 %v492, 90
      %v496 = vpop.permute.xlu0 %495
      %v497 = vrot.slane %v494, 4
      %v498 = vrot.slane %v496, 4
      %v499 = vsel %vm287, %v497, %v498
      %vm500 = vcmask 736256
      %v501 = vsel %vm500, %v494, %v499
      %504 = vst [vmem:[#allocation2 + $0x30] sm:$0x33] %v501
      %505 = vst.msk [vmem:[#allocation2 + $0x38] sm:$0x3] %vm262, %v496
      %v506 = vld [vmem:[%s1] sm:$0xf]
      %v507 = vld [vmem:[#allocation2] sm:$0xff]
      %v508 = vld [vmem:[#allocation2 + $0x8] sm:$0xf]
      %v509 = vld [vmem:[#allocation2 + $0xc] sm:$0xff]
      %v510 = vld [vmem:[#allocation2 + $0x14] sm:$0xf]
      %v511 = vld [vmem:[#allocation2 + $0x18] sm:$0xff]
      %v512 = vld [vmem:[#allocation2 + $0x20] sm:$0xf]
      %v513 = vld [vmem:[#allocation2 + $0x24] sm:$0xff]
      %v514 = vld [vmem:[#allocation2 + $0x2c] sm:$0xf]
      %v515 = vld [vmem:[#allocation2 + $0x30] sm:$0x33]
      %v516 = vld [vmem:[#allocation2 + $0x38] sm:$0x3]
      %v527 = vunpack.c.l.b16 %v507
      %v528 = vunpack.c.h.b16 %v507
      %v529 = vunpack.c.l.b16 %v508
      %v530 = vunpack.c.l.b16 %v509
      %v531 = vunpack.c.h.b16 %v509
      %v532 = vunpack.c.l.b16 %v510
      %v533 = vunpack.c.l.b16 %v511
      %v534 = vunpack.c.h.b16 %v511
      %v535 = vunpack.c.l.b16 %v512
      %v536 = vunpack.c.l.b16 %v513
      %v537 = vunpack.c.h.b16 %v513
      %v538 = vunpack.c.l.b16 %v514
      %v539 = vunpack.c.l.b16 %v515
      %v540 = vunpack.c.h.b16 %v515
      %v541 = vunpack.c.l.b16 %v516
      %v542 = vpack.c.b16 %v530, %v527
      %v543 = vpack.c.b16 %v531, %v528
      %v544 = vpack.c.b16 %v532, %v529
      %v545 = vpack.c.b16 %v536, %v533
      %v546 = vpack.c.b16 %v537, %v534
      %v547 = vpack.c.b16 %v538, %v535
      %v548 = vpack.c.b16 %v539, %v539
      %v549 = vpack.c.b16 %v540, %v540
      %v550 = vpack.c.b16 %v541, %v541
      %vm557 = vcmask 293888
      %v559 = vsel %vm557, %v506, 0
      %vm561 = vcmask 1041408
      %v563 = vsel %vm561, %v548, 0
      %v566 = vsel %vm561, %v549, 0
      %v569 = vsel %vm561, %v550, 0
      %571 = vmatprep.subr.bf16.mxu0 %v543
      %572 = vmatpush1.bf16.msra.mxu0 %v542
      %573 = vmatprep.subr.bf16.mxu0 %v546
      %574 = vmatpush1.bf16.msra.mxu0 %v545
      %575 = vmatprep.subr.bf16.mxu0 %v566
      %576 = vmatpush1.bf16.msra.mxu0 %v563
      %577 = vmatprep.subr.bf16.mxu0 0
      %578 = vmatpush1.bf16.msra.mxu0 0
      %579 = vmatprep.subr.bf16.mxu0 0
      %580 = vmatpush1.bf16.msra.mxu0 0
      %581 = vmatprep.subr.bf16.mxu0 0
      %582 = vmatpush1.bf16.msra.mxu0 0
      %583 = vmatprep.subr.bf16.mxu0 0
      %584 = vmatpush1.bf16.msra.mxu0 0
      %585 = vmatprep.subr.bf16.mxu0 0
      %586 = vmatpush1.bf16.msra.mxu0 0
      %587 = vmatprep.subr.bf16.mxu0 0
      %588 = vmatpush1.bf16.msra.mxu0 0
      %589 = vmatprep.subr.bf16.mxu0 0
      %590 = vmatpush1.bf16.msra.mxu0 0
      %591 = vmatprep.subr.bf16.mxu0 0
      %592 = vmatpush1.bf16.msra.mxu0 0
      %593 = vmatprep.subr.bf16.mxu0 0
      %594 = vmatpush1.bf16.msra.mxu0 0
      %595 = vmatprep.subr.bf16.mxu0 0
      %596 = vmatpush1.bf16.msra.mxu0 0
      %597 = vmatprep.subr.bf16.mxu0 0
      %598 = vmatpush1.bf16.msra.mxu0 0
      %599 = vmatprep.subr.bf16.mxu0 0
      %600 = vmatpush1.bf16.msra.mxu0 0
      %601 = vmatprep.subr.bf16.mxu0 0
      %602 = vmatpush1.bf16.msra.mxu0 0
      %603 = vmatprep.mubr.bf16.mxu0 0
      %604 = vmatmul.mubr.bf16.gmra.mrb[0].mxu0 %v559
      %v605 = vpop.f32.mrb[0].mxu0
      %v606 = vadd.f32 0.0, %v605
      %v607 = vpop.f32.mrb[0].mxu0
      %v608 = vadd.f32 0.0, %v607
      %v609 = vpop.f32.mrb[0].mxu0
      %v610 = vpop.f32.mrb[0].mxu0
      %611 = vdwg.mxu0
      %612 = vmatprep.subr.bf16.mxu0 0
      %613 = vmatpush1.bf16.msra.mxu0 %v544
      %614 = vmatprep.subr.bf16.mxu0 0
      %615 = vmatpush1.bf16.msra.mxu0 %v547
      %616 = vmatprep.subr.bf16.mxu0 0
      %617 = vmatpush1.bf16.msra.mxu0 %v569
      %618 = vmatprep.subr.bf16.mxu0 0
      %619 = vmatpush1.bf16.msra.mxu0 0
      %620 = vmatprep.subr.bf16.mxu0 0
      %621 = vmatpush1.bf16.msra.mxu0 0
      %622 = vmatprep.subr.bf16.mxu0 0
      %623 = vmatpush1.bf16.msra.mxu0 0
      %624 = vmatprep.subr.bf16.mxu0 0
      %625 = vmatpush1.bf16.msra.mxu0 0
      %626 = vmatprep.subr.bf16.mxu0 0
      %627 = vmatpush1.bf16.msra.mxu0 0
      %628 = vmatprep.subr.bf16.mxu0 0
      %629 = vmatpush1.bf16.msra.mxu0 0
      %630 = vmatprep.subr.bf16.mxu0 0
      %631 = vmatpush1.bf16.msra.mxu0 0
      %632 = vmatprep.subr.bf16.mxu0 0
      %633 = vmatpush1.bf16.msra.mxu0 0
      %634 = vmatprep.subr.bf16.mxu0 0
      %635 = vmatpush1.bf16.msra.mxu0 0
      %636 = vmatprep.subr.bf16.mxu0 0
      %637 = vmatpush1.bf16.msra.mxu0 0
      %638 = vmatprep.subr.bf16.mxu0 0
      %639 = vmatpush1.bf16.msra.mxu0 0
      %640 = vmatprep.subr.bf16.mxu0 0
      %641 = vmatpush1.bf16.msra.mxu0 0
      %642 = vmatprep.subr.bf16.mxu0 0
      %643 = vmatpush1.bf16.msra.mxu0 0
      %644 = vmatprep.mubr.bf16.mxu0 0
      %645 = vmatmul.mubr.bf16.gmra.mrb[0].mxu0 %v559
      %v646 = vpop.f32.mrb[0].mxu0
      %v647 = vadd.f32 0.0, %v646
      %v648 = vpop.f32.mrb[0].mxu0
      %v649 = vpop.f32.mrb[0].mxu0
      %v650 = vpop.f32.mrb[0].mxu0
      %651 = vdwg.mxu0
      %v652 = vsel %vm232, 1, 0
      %v653 = vsel %vm233, 1, 0
      %v654 = vsel %vm234, 1, 0
      %vm655 = vcmp.eq.s32.totalorder %v652, 1
      %vm656 = vcmp.eq.s32.totalorder %v653, 1
      %vm657 = vcmp.eq.s32.totalorder %v654, 1
      %v658 = vsel %vm655, %v606, 0.0
      %v659 = vsel %vm656, %v608, 0.0
      %v660 = vsel %vm657, %v647, 0.0
      %v661 = vadd.f32 %v658, %v659
      %v662 = vadd.f32 %v661, %v660
      %663 = vadd.xlane.f32.xlu0 %v662
      %v664 = vpop.xlane.xlu0 %663
      %v665 = vmul.f32 %v658, %v658
      %v666 = vmul.f32 %v659, %v659
      %v667 = vmul.f32 %v660, %v660
      %v668 = vadd.f32 %v665, %v666
      %v669 = vadd.f32 %v668, %v667
      %670 = vadd.xlane.f32.xlu0 %v669
      %v671 = vpop.xlane.xlu0 %670
      %v672 = vmul.f32 %v664, 0.00390625
      %v673 = vmul.f32 %v671, 0.00390625
      %v674 = vmul.f32 %v672, %v672
      %v675 = vsub.f32 %v673, %v674
      %v676 = vmax.f32 %v675, 0.0
      %v677 = vadd.f32 %v676, 1e-05
      %v678 = vrsqrt.pop %v677
      %v679 = vmul.f32 %v172, %v678
      %v680 = vsub.f32 %v606, %v672
      %v681 = vsub.f32 %v608, %v672
      %v682 = vsub.f32 %v647, %v672
      %684 = vset.pattern.permute.xlu0 0
      %685 = vperm.xlu0 %684, %v679
      %v686 = vpop.permute.xlu0 %685
      %v688 = vmul.f32 %v680, %v686
      %v689 = vmul.f32 %v681, %v686
      %v690 = vmul.f32 %v682, %v686
      %692 = vset.pattern.permute.xlu0 0
      %693 = vperm.xlu0 %692, %v173
      %v694 = vpop.permute.xlu0 %693
      %v696 = vadd.f32 %v688, %v694
      %v697 = vadd.f32 %v689, %v694
      %v698 = vadd.f32 %v690, %v694
      %v699 = vmax.f32 %v696, 0.0
      %v700 = vmax.f32 %v697, 0.0
      %v701 = vmax.f32 %v698, 0.0
      %702 = vst [vmem:[%s170] sm:$0xff] %v699
      %703 = vst [vmem:[%s170 + $0x8] sm:$0xff] %v700
      %704 = vst [vmem:[%s170 + $0x10] sm:$0xff] %v701
      %p705 = scmp.lt.s32.totalorder %s14, 1
      %s706 = scalar_select %p705, %s14, 1
      %s707 = smul.addr %s706, 3
      %s708 = smul.addr %s707, 8
      %s709 = scalar_lea.vmem %s3, %s708
      // Predicated region
      $region33: #{conv_block.1} parent=31 // pred_check
        %p710 = pneg %p100
      $region34: #{conv_block.1} parent=31 // pred_check_branch
        %712 = sbr.rel (%p710) target = $region36
      $region35: #{conv_block.1} parent=31 // pred_region
        _
      $region36: #{conv_block.1} parent=31 // pred_fallthru
        _
    $region32: #{conv_block.1} parent=5 // pred_fallthru
      _
    %p713 = scmp.le.s32.totalorder 2, %s9
    // Predicated region
    $region37: #{conv_block.1} parent=5 // pred_check
      %p714 = pneg %p713
    $region38: #{conv_block.1} parent=5 // pred_check_branch
      %716 = sbr.rel (%p714) target = $region40
    $region39: #{conv_block.1} parent=5 // pred_region
      %s717 = ssub.s32 %s9, 2
      // Predicated region
      $region41: #{conv_block.1} parent=39 // pred_check
        %p718 = pneg %p106
      $region42: #{conv_block.1} parent=39 // pred_check_branch
        %720 = sbr.rel (%p718) target = $region44
      $region43: #{conv_block.1} parent=39 // pred_region
        %p721 = scmp.lt.s32.totalorder %s15, 1
        %s722 = scalar_select %p721, %s15, 1
        %s723 = smul.addr %s722, 3
        %s724 = smul.addr %s723, 8
        %s725 = scalar_lea.vmem %s3, %s724
      $region44: #{conv_block.1} parent=39 // pred_fallthru
        _
    $region40: #{conv_block.1} parent=5 // pred_fallthru
      _
  $region6: #{conv_block.1} parent=0 // loop_footer
    %s13 = sadd.s32 1, %s9
  $region7: #{conv_block.1} parent=0 // loop_footer_branch
    %8 = sbr.rel target = $region3
  $region8: #{conv_block.1} parent=0 // loop_exit
    _

</llo_original>
